<compile_context>
chip_gen: v7x
topology: tpu7x:2x2x1
jax: 0.10.0
libtpu: 0.0.40
codegen_flags: <defaults>
</compile_context>

<pallas_src>
import math
import functools

import jax
import jax.numpy as jnp
from jax.experimental import pallas as pl
from jax.experimental.pallas import tpu as pltpu


# ---------------------------------------------------------------------------
# Kernel 1: K/V projection — computed once per token (not once per query tile).
# ---------------------------------------------------------------------------
def _kv_proj_kernel(x_ref, wk_ref, bk_ref, wv_ref, bv_ref, k_ref, v_ref,
                    *, head, q_k_size, v_size):
    f32 = jnp.float32
    x = x_ref[0]                                                         # (TS, E) bf16
    ts = x.shape[0]
    k = jnp.dot(x, wk_ref[...], preferred_element_type=f32) + bk_ref[...]   # (TS, H*Dk) f32
    v = jnp.dot(x, wv_ref[...], preferred_element_type=f32) + bv_ref[...]   # (TS, H*Dv) f32
    # Head-major layout written once so the attention kernel never relayouts K/V.
    k_ref[0] = k.reshape(ts, head, q_k_size).transpose(1, 0, 2).astype(k_ref.dtype)
    v_ref[0] = v.reshape(ts, head, v_size).transpose(1, 0, 2).astype(v_ref.dtype)


# ---------------------------------------------------------------------------
# Kernel 2: fused Q-proj + masked attention + Wz + LN1 + FFN + LN2.
# ---------------------------------------------------------------------------
def _encoder_block_kernel(
    xq_ref, kh_ref, vh_ref, mask_ref,
    wq_ref, bq_ref, wz_ref, bz_ref,
    g1_ref, be1_ref,
    w1_ref, bf1_ref, w2_ref, bf2_ref,
    g2_ref, be2_ref,
    out_ref,
    *, head, q_k_size, v_size,
):
    f32 = jnp.float32
    bf16 = jnp.bfloat16

    xq = xq_ref[0]                     # (TQ, E) f32 — kept f32 for the residual
    kh = kh_ref[0]                     # (H, S, Dk) bf16 — precomputed, constant over q axis
    vh = vh_ref[0]                     # (H, S, Dv) bf16
    masked = mask_ref[0] > 0.5         # (TQ, S) bool — computed once, shared by all heads

    tq = xq.shape[0]

    # Q projection; 1/sqrt(Dk) already folded into wq/bq by the wrapper.
    q = jnp.dot(xq.astype(bf16), wq_ref[...], preferred_element_type=f32) + bq_ref[...]
    qh = q.reshape(tq, head, q_k_size).transpose(1, 0, 2).astype(bf16)   # (H, TQ, Dk)

    # Batched attention over heads — contraction on the last axis (no K transpose).
    s = jnp.einsum('hqd,hkd->hqk', qh, kh, preferred_element_type=f32)   # (H, TQ, S)
    s = jnp.where(masked[None, :, :], -1e9, s)                           # masked_fill(mask_pad, -1e9)

    m = jnp.max(s, axis=-1, keepdims=True)
    p = jnp.exp(s - m)                                                   # un-normalized probs
    denom = jnp.sum(p, axis=-1, keepdims=True)                           # (H, TQ, 1)

    ctx = jnp.einsum('hqk,hkd->hqd', p.astype(bf16), vh,
                     preferred_element_type=f32)                         # (H, TQ, Dv)
    # Deferred softmax normalization: scale the small (H,TQ,Dv) context instead
    # of the (H,TQ,S) probability slab.
    ctx = ctx * pl.reciprocal(denom, approx=True)
    ctx = ctx.transpose(1, 0, 2).reshape(tq, head * v_size)              # concat heads

    # ---- output projection Wz ----------------------------------------------
    z = jnp.dot(ctx.astype(bf16), wz_ref[...], preferred_element_type=f32) + bz_ref[...]

    # ---- residual + LayerNorm1 (f32) ----------------------------------------
    h1 = z + xq
    mu1 = jnp.mean(h1, axis=-1, keepdims=True)
    var1 = jnp.mean((h1 - mu1) ** 2, axis=-1, keepdims=True)
    o1 = (h1 - mu1) * jax.lax.rsqrt(var1 + 1e-5) * g1_ref[...] + be1_ref[...]

    # ---- feed-forward (bf16 MXU, f32 accumulate) -----------------------------
    ff = jnp.dot(o1.astype(bf16), w1_ref[...], preferred_element_type=f32) + bf1_ref[...]
    ff = jnp.maximum(ff, 0.0)
    ff = jnp.dot(ff.astype(bf16), w2_ref[...], preferred_element_type=f32) + bf2_ref[...]

    # ---- residual + LayerNorm2 (f32) ----------------------------------------
    h2 = ff + o1
    mu2 = jnp.mean(h2, axis=-1, keepdims=True)
    var2 = jnp.mean((h2 - mu2) ** 2, axis=-1, keepdims=True)
    out_ref[0] = ((h2 - mu2) * jax.lax.rsqrt(var2 + 1e-5) * g2_ref[...]
                  + be2_ref[...]).astype(out_ref.dtype)


def _derive_vmem_limit_bytes():
    """Per-TensorCore VMEM budget with compiler headroom (v7x: 64 MiB, v5e/v6e: 128 MiB)."""
    cap = 64 * 1024 * 1024
    try:
        cap = int(getattr(pltpu.get_tpu_info(), "vmem_capacity_bytes", cap)) or cap
    except Exception:
        pass
    # Leave >= 12 MiB of compiler headroom; never request more than ~100 MiB.
    return max(32 * 1024 * 1024, min(cap - 12 * 1024 * 1024, 100 * 1024 * 1024))


def encoder_block(x, mask_pad, params, *, head, q_k_size, v_size, block_q=None):
    """x: (B, S, E) f32, mask_pad: (B, S, S) float (1.0 == padded key slot)."""
    B, S, E = x.shape
    HDk = head * q_k_size
    HDv = head * v_size
    F = params["w1"].shape[1]
    f32, bf16 = jnp.float32, jnp.bfloat16

    vmem_limit = _derive_vmem_limit_bytes()

    # ---- query-tile selection -------------------------------------------------
    if block_q is None:
        block_q = 256 if vmem_limit >= 96 * 1024 * 1024 else 128
    if block_q >= S:
        block_q = S                                   # single tile covers the sequence
    else:
        block_q = max(8, (block_q // 8) * 8)          # sublane-aligned tiles
        # Bound the all-heads score working set (~f32 scores + exp + bf16 copy)
        # to a fraction of VMEM; matters on v7x (64 MiB) at long S / many heads.
        while block_q > 8 and head * block_q * S * 10 > vmem_limit // 3:
            block_q = max(8, (block_q // 2) // 8 * 8)
        # TODO(synk): for very long S on v7x, add an inner key-tile loop with
        # online (flash-style) softmax so the live slab becomes (H, TQ, TK).

    S_pad = pl.cdiv(S, block_q) * block_q
    NQ = S_pad // block_q

    # ---- pad ragged sequences instead of blowing up the tile -------------------
    if S_pad != S:
        x = jnp.pad(x, ((0, 0), (0, S_pad - S), (0, 0)))
        mask_pad = jnp.pad(mask_pad, ((0, 0), (0, S_pad - S), (0, S_pad - S)),
                           constant_values=1.0)       # padded key slots are masked out

    # ---- wrapper-side casts / folds ---------------------------------------------
    scale = 1.0 / math.sqrt(q_k_size)
    wq = (params["wq"] * scale).astype(bf16)          # fold 1/sqrt(Dk) into the existing cast
    bq = (params["bq"] * scale).astype(f32)
    wk = params["wk"].astype(bf16)
    wv = params["wv"].astype(bf16)
    wz = params["wz"].astype(bf16)
    w1 = params["w1"].astype(bf16)
    w2 = params["w2"].astype(bf16)
    x_bf16 = x.astype(bf16)                           # matmul-only copy of x
    mask_bf16 = mask_pad.astype(bf16)                 # halves mask DMA vs f32

    # ---- kernel 1: K/V projection (once per token) ------------------------------
    proj_cost = pl.CostEstimate(
        flops=int(2 * B * S_pad * E * (HDk + HDv)),
        transcendentals=0,
        bytes_accessed=int(B * S_pad * E * 2
                           + E * (HDk + HDv) * 2 + (HDk + HDv) * 4
                           + B * head * S_pad * (q_k_size + v_size) * 2),
    )
    rep2 = lambda shape: pl.BlockSpec(shape, lambda b, s: (0,) * len(shape))
    k_heads, v_heads = pl.pallas_call(
        functools.partial(_kv_proj_kernel, head=head, q_k_size=q_k_size, v_size=v_size),
        out_shape=(jax.ShapeDtypeStruct((B, head, S_pad, q_k_size), bf16),
                   jax.ShapeDtypeStruct((B, head, S_pad, v_size), bf16)),
        grid_spec=pltpu.PrefetchScalarGridSpec(
            num_scalar_prefetch=0,
            grid=(B, NQ),
            in_specs=[
                pl.BlockSpec((1, block_q, E), lambda b, s: (b, s, 0)),   # x tile (bf16)
                rep2((E, HDk)), rep2((1, HDk)),                          # Wk, bk
                rep2((E, HDv)), rep2((1, HDv)),                          # Wv, bv
            ],
            out_specs=[
                pl.BlockSpec((1, head, block_q, q_k_size), lambda b, s: (b, 0, s, 0)),
                pl.BlockSpec((1, head, block_q, v_size), lambda b, s: (b, 0, s, 0)),
            ],
        ),
        compiler_params=pltpu.CompilerParams(
            dimension_semantics=("parallel", "parallel"),
            vmem_limit_bytes=vmem_limit),
        cost_estimate=proj_cost,
    )(x_bf16, wk, params["bk"], wv, params["bv"])

    # ---- kernel 2: fused attention + FFN block -----------------------------------
    main_cost = pl.CostEstimate(
        flops=int(2 * B * S_pad * E * HDk
                  + 2 * B * head * S_pad * S_pad * (q_k_size + v_size)
                  + 2 * B * S_pad * HDv * E
                  + 4 * B * S_pad * E * F),
        transcendentals=int(B * head * S_pad * S_pad),
        bytes_accessed=int(2 * B * S_pad * E * 4
                           + B * head * S_pad * (q_k_size + v_size) * 2
                           + B * S_pad * S_pad * 2
                           + (E * HDk + HDv * E + 2 * E * F) * 2
                           + (HDk + 3 * E + F) * 4),
    )
    rep = lambda shape: pl.BlockSpec(shape, lambda b, q: (0,) * len(shape))
    out = pl.pallas_call(
        functools.partial(_encoder_block_kernel, head=head, q_k_size=q_k_size, v_size=v_size),
        out_shape=jax.ShapeDtypeStruct((B, S_pad, E), f32),
        grid_spec=pltpu.PrefetchScalarGridSpec(
            num_scalar_prefetch=0,
            grid=(B, NQ),
            in_specs=[
                pl.BlockSpec((1, block_q, E), lambda b, q: (b, q, 0)),             # x query rows (f32)
                pl.BlockSpec((1, head, S_pad, q_k_size), lambda b, q: (b, 0, 0, 0)),  # K (bf16, head-major)
                pl.BlockSpec((1, head, S_pad, v_size), lambda b, q: (b, 0, 0, 0)),    # V (bf16, head-major)
                pl.BlockSpec((1, block_q, S_pad), lambda b, q: (b, q, 0)),         # mask rows (bf16)
                rep((E, HDk)), rep((1, HDk)),                                      # Wq, bq (pre-scaled)
                rep((HDv, E)), rep((1, E)),                                        # Wz, bz
                rep((1, E)), rep((1, E)),                                          # LN1 gamma, beta
                rep((E, F)), rep((1, F)),                                          # FFN W1, b1
                rep((F, E)), rep((1, E)),                                          # FFN W2, b2
                rep((1, E)), rep((1, E)),                                          # LN2 gamma, beta
            ],
            out_specs=pl.BlockSpec((1, block_q, E), lambda b, q: (b, q, 0)),
        ),
        compiler_params=pltpu.CompilerParams(
            dimension_semantics=("parallel", "parallel"),
            vmem_limit_bytes=vmem_limit),
        cost_estimate=main_cost,
    )(
        x, k_heads, v_heads, mask_bf16,
        wq, bq,
        wz, params["bz"],
        params["g1"], params["be1"],
        w1, params["bf1"], w2, params["bf2"],
        params["g2"], params["be2"],
    )
    return out[:, :S, :] if S_pad != S else out


def _reference(x, mask_pad, p, *, head, q_k_size, v_size):
    """Pure-JAX f32 reference mirroring the PyTorch forward."""
    B, S, E = x.shape
    q = x @ p["wq"] + p["bq"]
    k = x @ p["wk"] + p["bk"]
    v = x @ p["wv"] + p["bv"]
    q = q.reshape(B, S, head, q_k_size).transpose(0, 2, 1, 3)
    k = k.reshape(B, S, head, q_k_size).transpose(0, 2, 1, 3)
    v = v.reshape(B, S, head, v_size).transpose(0, 2, 1, 3)
    s = jnp.einsum("bhqd,bhkd->bhqk", q, k) / math.sqrt(q_k_size)
    s = jnp.where(mask_pad[:, None, :, :] > 0.5, -1e9, s)
    a = jax.nn.softmax(s, axis=-1)
    z = jnp.einsum("bhqk,bhkd->bhqd", a, v).transpose(0, 2, 1, 3).reshape(B, S, head * v_size)
    z = z @ p["wz"] + p["bz"]

    def ln(h, g, b):
        mu = jnp.mean(h, -1, keepdims=True)
        var = jnp.mean((h - mu) ** 2, -1, keepdims=True)
        return (h - mu) * jax.lax.rsqrt(var + 1e-5) * g + b

    o1 = ln(z + x, p["g1"], p["be1"])
    ff = jnp.maximum(o1 @ p["w1"] + p["bf1"], 0.0) @ p["w2"] + p["bf2"]
    return ln(ff + o1, p["g2"], p["be2"])


if __name__ == "__main__":
    # Small shapes consistent with the module.
    B, S = 2, 8
    emd_size, f_size, head, v_size, q_k_size = 32, 64, 2, 16, 16
    HDk, HDv = head * q_k_size, head * v_size

    key = jax.random.PRNGKey(0)
    ks = jax.random.split(key, 12)

    def w(k, shape, scale=0.1):
        return jax.random.normal(k, shape, jnp.float32) * scale

    params = {
        "wq": w(ks[0], (emd_size, HDk)), "bq": jnp.zeros((1, HDk), jnp.float32),
        "wk": w(ks[1], (emd_size, HDk)), "bk": jnp.zeros((1, HDk), jnp.float32),
        "wv": w(ks[2], (emd_size, HDv)), "bv": jnp.zeros((1, HDv), jnp.float32),
        "wz": w(ks[3], (HDv, emd_size)), "bz": w(ks[4], (1, emd_size), 0.01),
        "g1": jnp.ones((1, emd_size), jnp.float32), "be1": jnp.zeros((1, emd_size), jnp.float32),
        "w1": w(ks[5], (emd_size, f_size)), "bf1": w(ks[6], (1, f_size), 0.01),
        "w2": w(ks[7], (f_size, emd_size)), "bf2": w(ks[8], (1, emd_size), 0.01),
        "g2": jnp.ones((1, emd_size), jnp.float32), "be2": jnp.zeros((1, emd_size), jnp.float32),
    }

    x = jax.random.normal(ks[9], (B, S, emd_size), jnp.float32)
    # mask_pad: mask out the last 2 key positions of batch element 1.
    mask_pad = jnp.zeros((B, S, S), jnp.float32)
    mask_pad = mask_pad.at[1, :, S - 2:].set(1.0)

    out = encoder_block(x, mask_pad, params,
                        head=head, q_k_size=q_k_size, v_size=v_size)
    out = jax.block_until_ready(out)

    ref = _reference(x, mask_pad, params,
                     head=head, q_k_size=q_k_size, v_size=v_size)
    assert out.shape == (B, S, emd_size)
    # Tolerance covers the intentional bf16 matmul quantization + approx reciprocal;
    # softmax / LayerNorm statistics remain f32 inside the kernels.
    assert jnp.allclose(out, ref, rtol=3e-2, atol=3e-2), "mismatch vs reference"

    print("KERNEL_OK")
</pallas_src>

<mosaic_0001>
module attributes {stable_mosaic.version = 11 : i64} {
  func.func @_kv_proj_kernel(%arg0: i32, %arg1: i32, %arg2: memref<1x8x32xbf16, #tpu.memory_space<vmem>>, %arg3: memref<32x32xbf16, #tpu.memory_space<vmem>>, %arg4: memref<1x32xf32, #tpu.memory_space<vmem>>, %arg5: memref<32x32xbf16, #tpu.memory_space<vmem>>, %arg6: memref<1x32xf32, #tpu.memory_space<vmem>>, %arg7: memref<1x2x8x16xbf16, #tpu.memory_space<vmem>>, %arg8: memref<1x2x8x16xbf16, #tpu.memory_space<vmem>>) attributes {dimension_semantics = [#tpu.dimension_semantics<parallel>, #tpu.dimension_semantics<parallel>], iteration_bounds = array<i64: 2, 1>, scalar_prefetch = 0 : i64, scratch_operands = 0 : i64, tpu.core_type = #tpu.core_type<tc>, window_params = [{transform_indices = @transform_0, window_bounds = array<i64: 1, 8, 32>}, {pipeline_mode = #tpu.pipeline_mode<synchronous>, transform_indices = @transform_1, window_bounds = array<i64: 32, 32>}, {pipeline_mode = #tpu.pipeline_mode<synchronous>, transform_indices = @transform_2, window_bounds = array<i64: 1, 32>}, {pipeline_mode = #tpu.pipeline_mode<synchronous>, transform_indices = @transform_3, window_bounds = array<i64: 32, 32>}, {pipeline_mode = #tpu.pipeline_mode<synchronous>, transform_indices = @transform_4, window_bounds = array<i64: 1, 32>}, {transform_indices = @transform_5, window_bounds = array<i64: 1, 2, 8, 16>}, {transform_indices = @transform_6, window_bounds = array<i64: 1, 2, 8, 16>}]} {
    %c0 = arith.constant 0 : index
    %c0_0 = arith.constant 0 : index
    %c0_1 = arith.constant 0 : index
    %0 = vector.load %arg2[%c0, %c0_0, %c0_1] : memref<1x8x32xbf16, #tpu.memory_space<vmem>>, vector<1x8x32xbf16>
    %1 = vector.shape_cast %0 : vector<1x8x32xbf16> to vector<8x32xbf16>
    %c0_2 = arith.constant 0 : index
    %c0_3 = arith.constant 0 : index
    %2 = vector.load %arg3[%c0_2, %c0_3] : memref<32x32xbf16, #tpu.memory_space<vmem>>, vector<32x32xbf16>
    %cst = arith.constant dense<0.000000e+00> : vector<8x32xf32>
    %3 = tpu.matmul %1, %2, %cst {dimension_numbers = #tpu.dot_dimension_numbers<[1], [0], [0], [1], [0, 0, 1, 1], [], []>} : vector<8x32xbf16>, vector<32x32xbf16>, vector<8x32xf32> -> vector<8x32xf32>
    %c0_4 = arith.constant 0 : index
    %c0_5 = arith.constant 0 : index
    %4 = vector.load %arg4[%c0_4, %c0_5] : memref<1x32xf32, #tpu.memory_space<vmem>>, vector<1x32xf32>
    %5 = vector.broadcast %4 : vector<1x32xf32> to vector<8x32xf32>
    %6 = arith.addf %3, %5 : vector<8x32xf32>
    %c0_6 = arith.constant 0 : index
    %c0_7 = arith.constant 0 : index
    %7 = vector.load %arg5[%c0_6, %c0_7] : memref<32x32xbf16, #tpu.memory_space<vmem>>, vector<32x32xbf16>
    %cst_8 = arith.constant dense<0.000000e+00> : vector<8x32xf32>
    %8 = tpu.matmul %1, %7, %cst_8 {dimension_numbers = #tpu.dot_dimension_numbers<[1], [0], [0], [1], [0, 0, 1, 1], [], []>} : vector<8x32xbf16>, vector<32x32xbf16>, vector<8x32xf32> -> vector<8x32xf32>
    %c0_9 = arith.constant 0 : index
    %c0_10 = arith.constant 0 : index
    %9 = vector.load %arg6[%c0_9, %c0_10] : memref<1x32xf32, #tpu.memory_space<vmem>>, vector<1x32xf32>
    %10 = vector.broadcast %9 : vector<1x32xf32> to vector<8x32xf32>
    %11 = arith.addf %8, %10 : vector<8x32xf32>
    %12 = vector.shape_cast %6 : vector<8x32xf32> to vector<8x2x16xf32>
    %13 = tpu.transpose %12, [1, 0, 2] : vector<8x2x16xf32> -> vector<2x8x16xf32>
    %14 = arith.truncf %13 : vector<2x8x16xf32> to vector<2x8x16xbf16>
    %c0_11 = arith.constant 0 : index
    %c0_12 = arith.constant 0 : index
    %c0_13 = arith.constant 0 : index
    %c0_14 = arith.constant 0 : index
    %15 = vector.load %arg7[%c0_11, %c0_12, %c0_13, %c0_14] : memref<1x2x8x16xbf16, #tpu.memory_space<vmem>>, vector<1x2x8x16xbf16>
    %16 = vector.shape_cast %15 : vector<1x2x8x16xbf16> to vector<2x8x16xbf16>
    %17 = vector.shape_cast %14 : vector<2x8x16xbf16> to vector<1x2x8x16xbf16>
    tpu.vector_store %arg7[%c0_11, %c0_12, %c0_13, %c0_14], %17 {strides = array<i32>} : memref<1x2x8x16xbf16, #tpu.memory_space<vmem>>, vector<1x2x8x16xbf16>,
    %18 = vector.shape_cast %11 : vector<8x32xf32> to vector<8x2x16xf32>
    %19 = tpu.transpose %18, [1, 0, 2] : vector<8x2x16xf32> -> vector<2x8x16xf32>
    %20 = arith.truncf %19 : vector<2x8x16xf32> to vector<2x8x16xbf16>
    %c0_15 = arith.constant 0 : index
    %c0_16 = arith.constant 0 : index
    %c0_17 = arith.constant 0 : index
    %c0_18 = arith.constant 0 : index
    %21 = vector.load %arg8[%c0_15, %c0_16, %c0_17, %c0_18] : memref<1x2x8x16xbf16, #tpu.memory_space<vmem>>, vector<1x2x8x16xbf16>
    %22 = vector.shape_cast %21 : vector<1x2x8x16xbf16> to vector<2x8x16xbf16>
    %23 = vector.shape_cast %20 : vector<2x8x16xbf16> to vector<1x2x8x16xbf16>
    tpu.vector_store %arg8[%c0_15, %c0_16, %c0_17, %c0_18], %23 {strides = array<i32>} : memref<1x2x8x16xbf16, #tpu.memory_space<vmem>>, vector<1x2x8x16xbf16>,
    return
  }
  func.func @transform_0(%arg0: i32, %arg1: i32) -> (i32, i32, i32) {
    %c0_i32 = arith.constant 0 : i32
    %c0_i32_0 = arith.constant 0 : i32
    return %arg0, %arg1, %c0_i32 : i32, i32, i32
  }
  func.func @transform_1(%arg0: i32, %arg1: i32) -> (i32, i32) {
    %c0_i32 = arith.constant 0 : i32
    %c0_i32_0 = arith.constant 0 : i32
    %c0_i32_1 = arith.constant 0 : i32
    return %c0_i32, %c0_i32_0 : i32, i32
  }
  func.func @transform_2(%arg0: i32, %arg1: i32) -> (i32, i32) {
    %c0_i32 = arith.constant 0 : i32
    %c0_i32_0 = arith.constant 0 : i32
    %c0_i32_1 = arith.constant 0 : i32
    return %c0_i32, %c0_i32_0 : i32, i32
  }
  func.func @transform_3(%arg0: i32, %arg1: i32) -> (i32, i32) {
    %c0_i32 = arith.constant 0 : i32
    %c0_i32_0 = arith.constant 0 : i32
    %c0_i32_1 = arith.constant 0 : i32
    return %c0_i32, %c0_i32_0 : i32, i32
  }
  func.func @transform_4(%arg0: i32, %arg1: i32) -> (i32, i32) {
    %c0_i32 = arith.constant 0 : i32
    %c0_i32_0 = arith.constant 0 : i32
    %c0_i32_1 = arith.constant 0 : i32
    return %c0_i32, %c0_i32_0 : i32, i32
  }
  func.func @transform_5(%arg0: i32, %arg1: i32) -> (i32, i32, i32, i32) {
    %c0_i32 = arith.constant 0 : i32
    %c0_i32_0 = arith.constant 0 : i32
    %c0_i32_1 = arith.constant 0 : i32
    return %arg0, %c0_i32, %arg1, %c0_i32_0 : i32, i32, i32, i32
  }
  func.func @transform_6(%arg0: i32, %arg1: i32) -> (i32, i32, i32, i32) {
    %c0_i32 = arith.constant 0 : i32
    %c0_i32_0 = arith.constant 0 : i32
    %c0_i32_1 = arith.constant 0 : i32
    return %arg0, %c0_i32, %arg1, %c0_i32_0 : i32, i32, i32, i32
  }
}

</mosaic_0001>

<llo_original>
// kernel: tpu_custom_call.1
$region0: #{tpu_custom_call.1}
  #allocation0 [shape = 'u32[]', space=smem, size = 0x4, offset = 0x4, fixed_abs, tag = 'smem constant byte address 0x4 - core index']
  #allocation1 [shape = 'u32[144,128]{1,0:T(1,128)}', space=vmem, size = 0x12000, scoped, tag = 'internal scratch']
  %s0 = inlined_call_operand.hbm [shape: bf16[2,8,32], index: 0, kind: input, shape index: {}]
  %s1 = inlined_call_operand.hbm [shape: bf16[32,32], index: 1, kind: input, shape index: {}]
  %s2 = inlined_call_operand.vmem [shape: f32[1,32], index: 2, kind: input, shape index: {}]
  %s3 = inlined_call_operand.hbm [shape: bf16[32,32], index: 3, kind: input, shape index: {}]
  %s4 = inlined_call_operand.vmem [shape: f32[1,32], index: 4, kind: input, shape index: {}]
  %s5 = inlined_call_operand.hbm [shape: bf16[2,2,8,16], index: 5, kind: output, shape index: {0}]
  %s6 = inlined_call_operand.hbm [shape: bf16[2,2,8,16], index: 6, kind: output, shape index: {1}]
  %7 = xla_tuple %s5, %s6
  %s8 = sld [smem:[#allocation0]]
  $region73: #{tpu_custom_call.1} parent=0
    _
  %s10 = ssub.s32 1, %s8
  %s11 = scalar_select 0, %s10, %s8
  $region1: #{tpu_custom_call.1} parent=0
    #allocation2 [shape = 'u8[4096]{0}', space=vmem, size = 0x1000, scoped, tag = 'input window, operand 0']
    #allocation3 [shape = 's32[2]{0}', space=sflag, size = 0x8, scoped, tag = 'scoped memory for tpu_custom_call.1']
    #allocation4 [shape = 's32[2]{0}', space=sflag, size = 0x8, scoped, tag = 'scoped memory for tpu_custom_call.1']
    #allocation5 [shape = 'u8[8192]{0}', space=vmem, size = 0x2000, scoped, tag = 'input window, operand 1, single buffered']
    #allocation6 [shape = 's32[1]{0}', space=sflag, size = 0x4, scoped, tag = 'scoped memory for tpu_custom_call.1']
    #allocation7 [shape = 'u8[8192]{0}', space=vmem, size = 0x2000, scoped, tag = 'input window, operand 3, single buffered']
    #allocation8 [shape = 'u8[8192]{0}', space=vmem, size = 0x2000, scoped, tag = 'output window, operand 0']
    #allocation9 [shape = 'u8[8192]{0}', space=vmem, size = 0x2000, scoped, tag = 'output window, operand 1']
    #allocation10 [shape = 's32[2]{0}', space=sflag, size = 0x8, scoped, tag = 'scoped memory for tpu_custom_call.1']
    %12 = vsyncpa [#allocation3], 0
    %s13 = scalar_lea.sflag [#allocation3], 1
    %14 = vsyncpa %s13, 0
    %15 = vsyncpa [#allocation6], 0
    %16 = vsyncpa [#allocation4], 0
    %s17 = scalar_lea.sflag [#allocation4], 1
    %18 = vsyncpa %s17, 0
    %19 = vsyncpa [#allocation10], 0
    %s20 = scalar_lea.sflag [#allocation10], 1
    %21 = vsyncpa %s20, 0
    loop: start=0, step=1, limit=4
    $region2: #{tpu_custom_call.1} parent=1 // loop_pre_header
      _
    $region3: #{tpu_custom_call.1} parent=1 // loop_header
      %s23 = sphi 0, %s27
      %p24 = scmp.ge.s32.totalorder %s23, 4
      %s30 = sphi 0, %s42
      %s31 = sphi 0, %s38
      %s32 = sphi 0, %s30
      %s33 = sphi 0, %s31
      %s34 = sphi 0, %s32
      %s35 = sphi 0, %s33
      %s47 = sphi 0, %s49
      %s50 = sphi 0, %s47
      %s51 = sphi 0, %s50
      %s67 = sphi 0, %s51
      %s71 = sphi 0, %s71
      %s73 = sphi 0, %s71
      %s74 = sphi 0, %s73
      %s88 = sphi 0, %s74
      %s92 = sphi 0, %s92
      %s94 = sphi 0, %s92
      %s95 = sphi 0, %s94
      %s109 = sphi 0, %s95
      %s113 = sphi 0, %s113
      %s115 = sphi 0, %s113
      %s116 = sphi 0, %s115
      %s130 = sphi 0, %s116
      %s134 = sphi 0, %s134
      %s136 = sphi 0, %s134
      %s137 = sphi 0, %s136
      %s151 = sphi 0, %s137
      %s159 = sphi 0, %s161
      %s162 = sphi 0, %s159
      %s163 = sphi 0, %s162
      %s179 = sphi 0, %s163
      %s187 = sphi 0, %s189
      %s190 = sphi 0, %s187
      %s191 = sphi 0, %s190
      %s207 = sphi 0, %s191
    $region4: #{tpu_custom_call.1} parent=1 // loop_header_branch
      %26 = sbr.rel (%p24) target = $region8
    $region5: #{tpu_custom_call.1} parent=1 // loop_body
      %s28 = ssub.s32 %s23, 1
      %s29 = ssub.s32 %s23, 2
      %s36 = sadd.s32 1, %s31
      %p37 = scmp.ge.s32.totalorder %s36, 1
      %s38 = scalar_select %p37, 0, %s36
      %s39 = sadd.s32 1, %s30
      %s40 = scalar_select %p37, %s39, %s30
      %p41 = scmp.ge.s32.totalorder %s40, 2
      %s42 = scalar_select %p41, 0, %s40
      %s43 = ssub.s32 %s30, %s42
      %s44 = ssub.s32 %s31, %s38
      %s45 = sor.u32 %s43, %s44
      %p46 = scmp.eq.s32.totalorder %s45, 0
      %s48 = sadd.s32 %s47, 1
      %s49 = scalar_select %p46, %s47, %s48
      %p52 = pneg %p46
      %p53 = scmp.eq.s32.totalorder %s23, 1
      %p54 = por %p52, %p53
      %p55 = scmp.ne.s32.totalorder %s47, %s50
      %p56 = scmp.eq.s32.totalorder %s23, 0
      %p57 = por %p55, %p56
      %p58 = scmp.ne.s32.totalorder %s47, %s50
      %p59 = scmp.eq.s32.totalorder %s28, 1
      %p60 = por %p58, %p59
      %p61 = scmp.ne.s32.totalorder %s50, %s51
      %p62 = scmp.eq.s32.totalorder %s28, 0
      %p63 = por %p61, %p62
      %p64 = scmp.ne.s32.totalorder %s50, %s51
      %p65 = scmp.eq.s32.totalorder %s29, 1
      %p66 = por %p64, %p65
      %p68 = scmp.ne.s32.totalorder %s51, %s67
      %p69 = scmp.eq.s32.totalorder %s29, 0
      %p70 = por %p68, %p69
      %s72 = sadd.s32 %s71, 1
      %p75 = scmp.eq.s32.totalorder %s23, 1
      %p76 = scmp.ne.s32.totalorder %s71, %s73
      %p77 = scmp.eq.s32.totalorder %s23, 0
      %p78 = por %p76, %p77
      %p79 = scmp.ne.s32.totalorder %s71, %s73
      %p80 = scmp.eq.s32.totalorder %s28, 1
      %p81 = por %p79, %p80
      %p82 = scmp.ne.s32.totalorder %s73, %s74
      %p83 = scmp.eq.s32.totalorder %s28, 0
      %p84 = por %p82, %p83
      %p85 = scmp.ne.s32.totalorder %s73, %s74
      %p86 = scmp.eq.s32.totalorder %s29, 1
      %p87 = por %p85, %p86
      %p89 = scmp.ne.s32.totalorder %s74, %s88
      %p90 = scmp.eq.s32.totalorder %s29, 0
      %p91 = por %p89, %p90
      %s93 = sadd.s32 %s92, 1
      %p96 = scmp.eq.s32.totalorder %s23, 1
      %p97 = scmp.ne.s32.totalorder %s92, %s94
      %p98 = scmp.eq.s32.totalorder %s23, 0
      %p99 = por %p97, %p98
      %p100 = scmp.ne.s32.totalorder %s92, %s94
      %p101 = scmp.eq.s32.totalorder %s28, 1
      %p102 = por %p100, %p101
      %p103 = scmp.ne.s32.totalorder %s94, %s95
      %p104 = scmp.eq.s32.totalorder %s28, 0
      %p105 = por %p103, %p104
      %p106 = scmp.ne.s32.totalorder %s94, %s95
      %p107 = scmp.eq.s32.totalorder %s29, 1
      %p108 = por %p106, %p107
      %p110 = scmp.ne.s32.totalorder %s95, %s109
      %p111 = scmp.eq.s32.totalorder %s29, 0
      %p112 = por %p110, %p111
      %s114 = sadd.s32 %s113, 1
      %p117 = scmp.eq.s32.totalorder %s23, 1
      %p118 = scmp.ne.s32.totalorder %s113, %s115
      %p119 = scmp.eq.s32.totalorder %s23, 0
      %p120 = por %p118, %p119
      %p121 = scmp.ne.s32.totalorder %s113, %s115
      %p122 = scmp.eq.s32.totalorder %s28, 1
      %p123 = por %p121, %p122
      %p124 = scmp.ne.s32.totalorder %s115, %s116
      %p125 = scmp.eq.s32.totalorder %s28, 0
      %p126 = por %p124, %p125
      %p127 = scmp.ne.s32.totalorder %s115, %s116
      %p128 = scmp.eq.s32.totalorder %s29, 1
      %p129 = por %p127, %p128
      %p131 = scmp.ne.s32.totalorder %s116, %s130
      %p132 = scmp.eq.s32.totalorder %s29, 0
      %p133 = por %p131, %p132
      %s135 = sadd.s32 %s134, 1
      %p138 = scmp.eq.s32.totalorder %s23, 1
      %p139 = scmp.ne.s32.totalorder %s134, %s136
      %p140 = scmp.eq.s32.totalorder %s23, 0
      %p141 = por %p139, %p140
      %p142 = scmp.ne.s32.totalorder %s134, %s136
      %p143 = scmp.eq.s32.totalorder %s28, 1
      %p144 = por %p142, %p143
      %p145 = scmp.ne.s32.totalorder %s136, %s137
      %p146 = scmp.eq.s32.totalorder %s28, 0
      %p147 = por %p145, %p146
      %p148 = scmp.ne.s32.totalorder %s136, %s137
      %p149 = scmp.eq.s32.totalorder %s29, 1
      %p150 = por %p148, %p149
      %p152 = scmp.ne.s32.totalorder %s137, %s151
      %p153 = scmp.eq.s32.totalorder %s29, 0
      %p154 = por %p152, %p153
      %s155 = ssub.s32 %s30, %s42
      %s156 = ssub.s32 %s31, %s38
      %s157 = sor.u32 %s155, %s156
      %p158 = scmp.eq.s32.totalorder %s157, 0
      %s160 = sadd.s32 %s159, 1
      %s161 = scalar_select %p158, %s159, %s160
      %p164 = pneg %p158
      %p165 = scmp.eq.s32.totalorder %s23, 1
      %p166 = por %p164, %p165
      %p167 = scmp.ne.s32.totalorder %s159, %s162
      %p168 = scmp.eq.s32.totalorder %s23, 0
      %p169 = por %p167, %p168
      %p170 = scmp.ne.s32.totalorder %s159, %s162
      %p171 = scmp.eq.s32.totalorder %s28, 1
      %p172 = por %p170, %p171
      %p173 = scmp.ne.s32.totalorder %s162, %s163
      %p174 = scmp.eq.s32.totalorder %s28, 0
      %p175 = por %p173, %p174
      %p176 = scmp.ne.s32.totalorder %s162, %s163
      %p177 = scmp.eq.s32.totalorder %s29, 1
      %p178 = por %p176, %p177
      %p180 = scmp.ne.s32.totalorder %s163, %s179
      %p181 = scmp.eq.s32.totalorder %s29, 0
      %p182 = por %p180, %p181
      %s183 = ssub.s32 %s30, %s42
      %s184 = ssub.s32 %s31, %s38
      %s185 = sor.u32 %s183, %s184
      %p186 = scmp.eq.s32.totalorder %s185, 0
      %s188 = sadd.s32 %s187, 1
      %s189 = scalar_select %p186, %s187, %s188
      %p192 = pneg %p186
      %p193 = scmp.eq.s32.totalorder %s23, 1
      %p194 = por %p192, %p193
      %p195 = scmp.ne.s32.totalorder %s187, %s190
      %p196 = scmp.eq.s32.totalorder %s23, 0
      %p197 = por %p195, %p196
      %p198 = scmp.ne.s32.totalorder %s187, %s190
      %p199 = scmp.eq.s32.totalorder %s28, 1
      %p200 = por %p198, %p199
      %p201 = scmp.ne.s32.totalorder %s190, %s191
      %p202 = scmp.eq.s32.totalorder %s28, 0
      %p203 = por %p201, %p202
      %p204 = scmp.ne.s32.totalorder %s190, %s191
      %p205 = scmp.eq.s32.totalorder %s29, 1
      %p206 = por %p204, %p205
      %p208 = scmp.ne.s32.totalorder %s191, %s207
      %p209 = scmp.eq.s32.totalorder %s29, 0
      %p210 = por %p208, %p209
      %p211 = scmp.le.s32.totalorder 1, %s23
      %p212 = scmp.lt.s32.totalorder %s23, 3
      %p213 = pnand %p211, %p212
      %p214 = pneg %p213
      // Predicated region
      $region9: #{tpu_custom_call.1} parent=5 // pred_check
        _
      $region10: #{tpu_custom_call.1} parent=5 // pred_check_branch
        %216 = sbr.rel (%p213) target = $region12
      $region11: #{tpu_custom_call.1} parent=5 // pred_region
        %s217 = ssub.s32 %s23, 1
        // Predicated region
        $region13: #{tpu_custom_call.1} parent=11 // pred_check
          %p218 = pneg %p84
        $region14: #{tpu_custom_call.1} parent=11 // pred_check_branch
          %220 = sbr.rel (%p218) target = $region16
        $region15: #{tpu_custom_call.1} parent=11 // pred_region
          %s222 = ssub.s32 256, 256
          %223 = vsyncadd [#allocation6], %s222
          %s224 = sshll.u32 [#allocation5], 4
          %s225 = int_to_ptr.vmem [resolvable:$true] %s224
          %230 = dma.hbm_to_vmem [thread:$0]  %s1, 256, %s225, [#allocation6], 64, 64, 4
        $region16: #{tpu_custom_call.1} parent=11 // pred_fallthru
          _
        // Predicated region
        $region17: #{tpu_custom_call.1} parent=11 // pred_check
          %p231 = pneg %p105
        $region18: #{tpu_custom_call.1} parent=11 // pred_check_branch
          %233 = sbr.rel (%p231) target = $region20
        $region19: #{tpu_custom_call.1} parent=11 // pred_region
          _
        $region20: #{tpu_custom_call.1} parent=11 // pred_fallthru
          _
        // Predicated region
        $region21: #{tpu_custom_call.1} parent=11 // pred_check
          %p234 = pneg %p126
        $region22: #{tpu_custom_call.1} parent=11 // pred_check_branch
          %236 = sbr.rel (%p234) target = $region24
        $region23: #{tpu_custom_call.1} parent=11 // pred_region
          %s238 = ssub.s32 256, 256
          %239 = vsyncadd [#allocation6], %s238
          %s240 = sshll.u32 [#allocation7], 4
          %s241 = int_to_ptr.vmem [resolvable:$true] %s240
          %246 = dma.hbm_to_vmem [thread:$0]  %s3, 256, %s241, [#allocation6], 64, 64, 4
        $region24: #{tpu_custom_call.1} parent=11 // pred_fallthru
          _
        // Predicated region
        $region25: #{tpu_custom_call.1} parent=11 // pred_check
          %p247 = pneg %p147
        $region26: #{tpu_custom_call.1} parent=11 // pred_check_branch
          %249 = sbr.rel (%p247) target = $region28
        $region27: #{tpu_custom_call.1} parent=11 // pred_region
          _
        $region28: #{tpu_custom_call.1} parent=11 // pred_fallthru
          _
      $region12: #{tpu_custom_call.1} parent=5 // pred_fallthru
        _
      %p250 = scmp.lt.s32.totalorder %s23, 2
      // Predicated region
      $region29: #{tpu_custom_call.1} parent=5 // pred_check
        %p251 = pneg %p250
      $region30: #{tpu_custom_call.1} parent=5 // pred_check_branch
        %253 = sbr.rel (%p251) target = $region32
      $region31: #{tpu_custom_call.1} parent=5 // pred_region
        // Predicated region
        $region33: #{tpu_custom_call.1} parent=31 // pred_check
          %p254 = pneg %p57
        $region34: #{tpu_custom_call.1} parent=31 // pred_check_branch
          %256 = sbr.rel (%p254) target = $region36
        $region35: #{tpu_custom_call.1} parent=31 // pred_region
          %s257 = sand.u32 %s47, 1
          %s258 = scalar_lea.sflag [#allocation3], %s257
          %s259 = sand.u32 %s47, 1
          %s260 = smul.addr %s259, 4
          %s261 = scalar_lea.vmem [#allocation2], %s260
          %s263 = ssub.s32 64, 64
          %264 = vsyncadd %s258, %s263
          %s265 = sadd.s32 %s31, %s30
          %s266 = smul.addr %s265, 64
          %s267 = scalar_lea.hbm %s0, %s266
          %s269 = sshll.u32 %s261, 4
          %s270 = int_to_ptr.vmem [resolvable:$true] %s269
          %272 = dma.hbm_to_vmem [thread:$0]  %s267, 64, %s270, %s258
        $region36: #{tpu_custom_call.1} parent=31 // pred_fallthru
          _
      $region32: #{tpu_custom_call.1} parent=5 // pred_fallthru
        _
      %p273 = scmp.le.s32.totalorder 1, %s23
      %p274 = scmp.lt.s32.totalorder %s23, 3
      %p275 = pnand %p273, %p274
      %p276 = pneg %p275
      // Predicated region
      $region37: #{tpu_custom_call.1} parent=5 // pred_check
        _
      $region38: #{tpu_custom_call.1} parent=5 // pred_check_branch
        %278 = sbr.rel (%p275) target = $region40
      $region39: #{tpu_custom_call.1} parent=5 // pred_region
        %s279 = ssub.s32 %s23, 1
        %s280 = sand.u32 %s50, 1
        %s281 = scalar_lea.sflag [#allocation3], %s280
        %s282 = sand.u32 %s50, 1
        %s283 = smul.addr %s282, 4
        %s284 = scalar_lea.vmem [#allocation2], %s283
        // Predicated region
        $region41: #{tpu_custom_call.1} parent=39 // pred_check
          %p285 = pneg %p63
        $region42: #{tpu_custom_call.1} parent=39 // pred_check_branch
          %287 = sbr.rel (%p285) target = $region44
        $region43: #{tpu_custom_call.1} parent=39 // pred_region
          %288 = dma.done %s281, 64
        $region44: #{tpu_custom_call.1} parent=39 // pred_fallthru
          _
        // Predicated region
        $region45: #{tpu_custom_call.1} parent=39 // pred_check
          %p289 = pneg %p84
        $region46: #{tpu_custom_call.1} parent=39 // pred_check_branch
          %291 = sbr.rel (%p289) target = $region48
        $region47: #{tpu_custom_call.1} parent=39 // pred_region
          %292 = dma.done [#allocation6], 256
        $region48: #{tpu_custom_call.1} parent=39 // pred_fallthru
          _
        // Predicated region
        $region49: #{tpu_custom_call.1} parent=39 // pred_check
          %p293 = pneg %p126
        $region50: #{tpu_custom_call.1} parent=39 // pred_check_branch
          %295 = sbr.rel (%p293) target = $region52
        $region51: #{tpu_custom_call.1} parent=39 // pred_region
          %296 = dma.done [#allocation6], 256
        $region52: #{tpu_custom_call.1} parent=39 // pred_fallthru
          _
        %s297 = sand.u32 %s50, 1
        %s298 = scalar_lea.sflag [#allocation3], %s297
        %s299 = sand.u32 %s50, 1
        %s300 = smul.addr %s299, 4
        %s301 = scalar_lea.vmem [#allocation2], %s300
        %p302 = pneg %p63
        %p303 = pneg %p60
        %p304 = pneg %p84
        %p305 = pneg %p81
        %p306 = pneg %p105
        %p307 = pneg %p102
        %p308 = pneg %p126
        %p309 = pneg %p123
        %p310 = pneg %p147
        %p311 = pneg %p144
        %p312 = pneg %p175
        %p313 = pneg %p172
        %s314 = sand.u32 %s162, 1
        %s315 = scalar_lea.sflag [#allocation4], %s314
        %s316 = sand.u32 %s162, 1
        %s317 = smul.addr %s316, 8
        %s318 = scalar_lea.vmem [#allocation8], %s317
        %p319 = pneg %p203
        %p320 = pneg %p200
        %s321 = sand.u32 %s190, 1
        %s322 = scalar_lea.sflag [#allocation10], %s321
        %s323 = sand.u32 %s190, 1
        %s324 = smul.addr %s323, 8
        %s325 = scalar_lea.vmem [#allocation9], %s324
        %v327 = vld [vmem:[%s284] sm:$0xf]
        %v328 = vld [vmem:[#allocation5] sm:$0xf]
        %v329 = vld [vmem:[#allocation5 + $0x4] sm:$0xf]
        %v330 = vld [vmem:[#allocation5 + $0x8] sm:$0xf]
        %v331 = vld [vmem:[#allocation5 + $0xc] sm:$0xf]
        %v332 = vld [vmem:[%s2] sm:$0x1]
        %v334 = vlaneseq
        %v335 = vshrl.u32 %v334, 7
        %v336 = vsub.s32 0, %v335
        %v337 = vrot.slane %v332, %v336
        %v343 = vunpack.c.l.b16 %v328
        %v344 = vunpack.c.l.b16 %v329
        %v345 = vunpack.c.l.b16 %v330
        %v346 = vunpack.c.l.b16 %v331
        %v347 = vpack.c.b16 %v344, %v343
        %v348 = vpack.c.b16 %v346, %v345
        %vm351 = vcmask 261120
        %v353 = vsel %vm351, %v327, 0
        %355 = vmatprep.subr.bf16.mxu0 0
        %356 = vmatpush1.bf16.msra.mxu0 %v347
        %357 = vmatprep.subr.bf16.mxu0 0
        %358 = vmatpush1.bf16.msra.mxu0 %v348
        %359 = vmatprep.subr.bf16.mxu0 0
        %360 = vmatpush1.bf16.msra.mxu0 0
        %361 = vmatprep.subr.bf16.mxu0 0
        %362 = vmatpush1.bf16.msra.mxu0 0
        %363 = vmatprep.subr.bf16.mxu0 0
        %364 = vmatpush1.bf16.msra.mxu0 0
        %365 = vmatprep.subr.bf16.mxu0 0
        %366 = vmatpush1.bf16.msra.mxu0 0
        %367 = vmatprep.subr.bf16.mxu0 0
        %368 = vmatpush1.bf16.msra.mxu0 0
        %369 = vmatprep.subr.bf16.mxu0 0
        %370 = vmatpush1.bf16.msra.mxu0 0
        %371 = vmatprep.subr.bf16.mxu0 0
        %372 = vmatpush1.bf16.msra.mxu0 0
        %373 = vmatprep.subr.bf16.mxu0 0
        %374 = vmatpush1.bf16.msra.mxu0 0
        %375 = vmatprep.subr.bf16.mxu0 0
        %376 = vmatpush1.bf16.msra.mxu0 0
        %377 = vmatprep.subr.bf16.mxu0 0
        %378 = vmatpush1.bf16.msra.mxu0 0
        %379 = vmatprep.subr.bf16.mxu0 0
        %380 = vmatpush1.bf16.msra.mxu0 0
        %381 = vmatprep.subr.bf16.mxu0 0
        %382 = vmatpush1.bf16.msra.mxu0 0
        %383 = vmatprep.subr.bf16.mxu0 0
        %384 = vmatpush1.bf16.msra.mxu0 0
        %385 = vmatprep.subr.bf16.mxu0 0
        %386 = vmatpush1.bf16.msra.mxu0 0
        %387 = vmatprep.mubr.bf16.mxu0 0
        %388 = vmatmul.mubr.bf16.gmra.mrb[0].mxu0 %v353
        %v389 = vpop.f32.mrb[0].mxu0
        %v390 = vadd.f32 %v337, %v389
        %v391 = vpop.f32.mrb[0].mxu0
        %v392 = vpop.f32.mrb[0].mxu0
        %v393 = vpop.f32.mrb[0].mxu0
        %394 = vdwg.mxu0
        %v395 = vld [vmem:[#allocation7] sm:$0xf]
        %v396 = vld [vmem:[#allocation7 + $0x4] sm:$0xf]
        %v397 = vld [vmem:[#allocation7 + $0x8] sm:$0xf]
        %v398 = vld [vmem:[#allocation7 + $0xc] sm:$0xf]
        %v399 = vld [vmem:[%s4] sm:$0x1]
        %v401 = vlaneseq
        %v402 = vshrl.u32 %v401, 7
        %v403 = vsub.s32 0, %v402
        %v404 = vrot.slane %v399, %v403
        %v410 = vunpack.c.l.b16 %v395
        %v411 = vunpack.c.l.b16 %v396
        %v412 = vunpack.c.l.b16 %v397
        %v413 = vunpack.c.l.b16 %v398
        %v414 = vpack.c.b16 %v411, %v410
        %v415 = vpack.c.b16 %v413, %v412
        %418 = vmatprep.subr.bf16.mxu0 0
        %419 = vmatpush1.bf16.msra.mxu0 %v414
        %420 = vmatprep.subr.bf16.mxu0 0
        %421 = vmatpush1.bf16.msra.mxu0 %v415
        %422 = vmatprep.subr.bf16.mxu0 0
        %423 = vmatpush1.bf16.msra.mxu0 0
        %424 = vmatprep.subr.bf16.mxu0 0
        %425 = vmatpush1.bf16.msra.mxu0 0
        %426 = vmatprep.subr.bf16.mxu0 0
        %427 = vmatpush1.bf16.msra.mxu0 0
        %428 = vmatprep.subr.bf16.mxu0 0
        %429 = vmatpush1.bf16.msra.mxu0 0
        %430 = vmatprep.subr.bf16.mxu0 0
        %431 = vmatpush1.bf16.msra.mxu0 0
        %432 = vmatprep.subr.bf16.mxu0 0
        %433 = vmatpush1.bf16.msra.mxu0 0
        %434 = vmatprep.subr.bf16.mxu0 0
        %435 = vmatpush1.bf16.msra.mxu0 0
        %436 = vmatprep.subr.bf16.mxu0 0
        %437 = vmatpush1.bf16.msra.mxu0 0
        %438 = vmatprep.subr.bf16.mxu0 0
        %439 = vmatpush1.bf16.msra.mxu0 0
        %440 = vmatprep.subr.bf16.mxu0 0
        %441 = vmatpush1.bf16.msra.mxu0 0
        %442 = vmatprep.subr.bf16.mxu0 0
        %443 = vmatpush1.bf16.msra.mxu0 0
        %444 = vmatprep.subr.bf16.mxu0 0
        %445 = vmatpush1.bf16.msra.mxu0 0
        %446 = vmatprep.subr.bf16.mxu0 0
        %447 = vmatpush1.bf16.msra.mxu0 0
        %448 = vmatprep.subr.bf16.mxu0 0
        %449 = vmatpush1.bf16.msra.mxu0 0
        %450 = vmatprep.mubr.bf16.mxu0 0
        %451 = vmatmul.mubr.bf16.gmra.mrb[0].mxu0 %v353
        %v452 = vpop.f32.mrb[0].mxu0
        %v453 = vadd.f32 %v404, %v452
        %v454 = vpop.f32.mrb[0].mxu0
        %v455 = vpop.f32.mrb[0].mxu0
        %v456 = vpop.f32.mrb[0].mxu0
        %457 = vdwg.mxu0
        %459 = vrot.lane.b32.xlu0 %v390, 112
        %v460 = vpop.permute.xlu0 %459
        %v462 = vcombine.high %v390, 0.0
        %v464 = vunpack.c.l.s4 1983009808
        %v465 = vunpack.c.0.s8 %v464
        %v466 = vlaneseq
        %v467 = vshrl.u32 %v466, 7
        %v468 = vsub.s32 %v465, %v467
        %v469 = vrot.slane %v390, %v468
        %v471 = vunpack.c.l.s4 1983009808
        %v472 = vunpack.c.0.s8 %v471
        %v473 = vlaneseq
        %v474 = vshrl.u32 %v473, 7
        %v475 = vsub.s32 %v472, %v474
        %v476 = vrot.slane %v462, %v475
        %v477 = vcombine.high %v460, 0.0
        %v479 = vunpack.c.l.s4 1983009808
        %v480 = vunpack.c.0.s8 %v479
        %v481 = vlaneseq
        %v482 = vshrl.u32 %v481, 7
        %v483 = vsub.s32 %v480, %v482
        %v484 = vrot.slane %v460, %v483
        %v486 = vunpack.c.l.s4 1983009808
        %v487 = vunpack.c.0.s8 %v486
        %v488 = vlaneseq
        %v489 = vshrl.u32 %v488, 7
        %v490 = vsub.s32 %v487, %v489
        %v491 = vrot.slane %v477, %v490
        %v492 = vcombine.low %v469, %v484
        %v493 = vcombine.high %v469, %v484
        %v495 = vunpack.c.l.s4 1934713408
        %v496 = vunpack.c.0.s8 %v495
        %v497 = vlaneseq
        %v498 = vshrl.u32 %v497, 7
        %v499 = vsub.s32 %v496, %v498
        %v500 = vrot.slane %v492, %v499
        %v502 = vunpack.c.l.s4 1934713408
        %v503 = vunpack.c.0.s8 %v502
        %v504 = vlaneseq
        %v505 = vshrl.u32 %v504, 7
        %v506 = vsub.s32 %v503, %v505
        %v507 = vrot.slane %v493, %v506
        %v508 = vcombine.low %v476, %v491
        %v509 = vcombine.high %v476, %v491
        %v511 = vunpack.c.l.s4 1934713408
        %v512 = vunpack.c.0.s8 %v511
        %v513 = vlaneseq
        %v514 = vshrl.u32 %v513, 7
        %v515 = vsub.s32 %v512, %v514
        %v516 = vrot.slane %v508, %v515
        %v518 = vunpack.c.l.s4 1934713408
        %v519 = vunpack.c.0.s8 %v518
        %v520 = vlaneseq
        %v521 = vshrl.u32 %v520, 7
        %v522 = vsub.s32 %v519, %v521
        %v523 = vrot.slane %v509, %v522
        %v524 = vcombine.high %v500, 0.0
        %v525 = vcombine.high %v507, 0.0
        %v526 = vcombine.high %v516, 0.0
        %v527 = vcombine.high %v523, 0.0
        %v528 = vcombine.low %v500, %v507
        %v530 = vunpack.c.l.s4 1983009808
        %v531 = vunpack.c.0.s8 %v530
        %v532 = vlaneseq
        %v533 = vshrl.u32 %v532, 7
        %v534 = vsub.s32 %v531, %v533
        %v535 = vrot.slane %v528, %v534
        %v536 = vcombine.low %v524, %v525
        %v538 = vunpack.c.l.s4 1983009808
        %v539 = vunpack.c.0.s8 %v538
        %v540 = vlaneseq
        %v541 = vshrl.u32 %v540, 7
        %v542 = vsub.s32 %v539, %v541
        %v543 = vrot.slane %v536, %v542
        %v544 = vcombine.low %v516, %v523
        %v546 = vunpack.c.l.s4 1983009808
        %v547 = vunpack.c.0.s8 %v546
        %v548 = vlaneseq
        %v549 = vshrl.u32 %v548, 7
        %v550 = vsub.s32 %v547, %v549
        %v551 = vrot.slane %v544, %v550
        %v552 = vcombine.low %v526, %v527
        %v554 = vunpack.c.l.s4 1983009808
        %v555 = vunpack.c.0.s8 %v554
        %v556 = vlaneseq
        %v557 = vshrl.u32 %v556, 7
        %v558 = vsub.s32 %v555, %v557
        %v559 = vrot.slane %v552, %v558
        %v560 = vcombine.low %v535, %v543
        %v562 = vunpack.c.l.s4 1934713408
        %v563 = vunpack.c.0.s8 %v562
        %v564 = vlaneseq
        %v565 = vshrl.u32 %v564, 7
        %v566 = vsub.s32 %v563, %v565
        %v567 = vrot.slane %v560, %v566
        %v568 = vcombine.low %v551, %v559
        %v570 = vunpack.c.l.s4 1934713408
        %v571 = vunpack.c.0.s8 %v570
        %v572 = vlaneseq
        %v573 = vshrl.u32 %v572, 7
        %v574 = vsub.s32 %v571, %v573
        %v575 = vrot.slane %v568, %v574
        %v576 = vcombine.low %v567, %v575
        %v577 = vcombine.high %v567, %v575
        %v578 = vpack.c.bf16 %v576, %v576
        %v579 = vpack.c.bf16 %v577, %v577
        %vm580 = vcmask 125952
        %581 = vst.msk [vmem:[%s318] sm:$0xf] %vm580, %v578
        %582 = vst.msk [vmem:[%s318 + $0x4] sm:$0xf] %vm580, %v579
        %584 = vrot.lane.b32.xlu0 %v453, 112
        %v585 = vpop.permute.xlu0 %584
        %v587 = vcombine.high %v453, 0.0
        %v589 = vunpack.c.l.s4 1983009808
        %v590 = vunpack.c.0.s8 %v589
        %v591 = vlaneseq
        %v592 = vshrl.u32 %v591, 7
        %v593 = vsub.s32 %v590, %v592
        %v594 = vrot.slane %v453, %v593
        %v596 = vunpack.c.l.s4 1983009808
        %v597 = vunpack.c.0.s8 %v596
        %v598 = vlaneseq
        %v599 = vshrl.u32 %v598, 7
        %v600 = vsub.s32 %v597, %v599
        %v601 = vrot.slane %v587, %v600
        %v602 = vcombine.high %v585, 0.0
        %v604 = vunpack.c.l.s4 1983009808
        %v605 = vunpack.c.0.s8 %v604
        %v606 = vlaneseq
        %v607 = vshrl.u32 %v606, 7
        %v608 = vsub.s32 %v605, %v607
        %v609 = vrot.slane %v585, %v608
        %v611 = vunpack.c.l.s4 1983009808
        %v612 = vunpack.c.0.s8 %v611
        %v613 = vlaneseq
        %v614 = vshrl.u32 %v613, 7
        %v615 = vsub.s32 %v612, %v614
        %v616 = vrot.slane %v602, %v615
        %v617 = vcombine.low %v594, %v609
        %v618 = vcombine.high %v594, %v609
        %v620 = vunpack.c.l.s4 1934713408
        %v621 = vunpack.c.0.s8 %v620
        %v622 = vlaneseq
        %v623 = vshrl.u32 %v622, 7
        %v624 = vsub.s32 %v621, %v623
        %v625 = vrot.slane %v617, %v624
        %v627 = vunpack.c.l.s4 1934713408
        %v628 = vunpack.c.0.s8 %v627
        %v629 = vlaneseq
        %v630 = vshrl.u32 %v629, 7
        %v631 = vsub.s32 %v628, %v630
        %v632 = vrot.slane %v618, %v631
        %v633 = vcombine.low %v601, %v616
        %v634 = vcombine.high %v601, %v616
        %v636 = vunpack.c.l.s4 1934713408
        %v637 = vunpack.c.0.s8 %v636
        %v638 = vlaneseq
        %v639 = vshrl.u32 %v638, 7
        %v640 = vsub.s32 %v637, %v639
        %v641 = vrot.slane %v633, %v640
        %v643 = vunpack.c.l.s4 1934713408
        %v644 = vunpack.c.0.s8 %v643
        %v645 = vlaneseq
        %v646 = vshrl.u32 %v645, 7
        %v647 = vsub.s32 %v644, %v646
        %v648 = vrot.slane %v634, %v647
        %v649 = vcombine.high %v625, 0.0
        %v650 = vcombine.high %v632, 0.0
        %v651 = vcombine.high %v641, 0.0
        %v652 = vcombine.high %v648, 0.0
        %v653 = vcombine.low %v625, %v632
        %v655 = vunpack.c.l.s4 1983009808
        %v656 = vunpack.c.0.s8 %v655
        %v657 = vlaneseq
        %v658 = vshrl.u32 %v657, 7
        %v659 = vsub.s32 %v656, %v658
        %v660 = vrot.slane %v653, %v659
        %v661 = vcombine.low %v649, %v650
        %v663 = vunpack.c.l.s4 1983009808
        %v664 = vunpack.c.0.s8 %v663
        %v665 = vlaneseq
        %v666 = vshrl.u32 %v665, 7
        %v667 = vsub.s32 %v664, %v666
        %v668 = vrot.slane %v661, %v667
        %v669 = vcombine.low %v641, %v648
        %v671 = vunpack.c.l.s4 1983009808
        %v672 = vunpack.c.0.s8 %v671
        %v673 = vlaneseq
        %v674 = vshrl.u32 %v673, 7
        %v675 = vsub.s32 %v672, %v674
        %v676 = vrot.slane %v669, %v675
        %v677 = vcombine.low %v651, %v652
        %v679 = vunpack.c.l.s4 1983009808
        %v680 = vunpack.c.0.s8 %v679
        %v681 = vlaneseq
        %v682 = vshrl.u32 %v681, 7
        %v683 = vsub.s32 %v680, %v682
        %v684 = vrot.slane %v677, %v683
        %v685 = vcombine.low %v660, %v668
        %v687 = vunpack.c.l.s4 1934713408
        %v688 = vunpack.c.0.s8 %v687
        %v689 = vlaneseq
        %v690 = vshrl.u32 %v689, 7
        %v691 = vsub.s32 %v688, %v690
        %v692 = vrot.slane %v685, %v691
        %v693 = vcombine.low %v676, %v684
        %v695 = vunpack.c.l.s4 1934713408
        %v696 = vunpack.c.0.s8 %v695
        %v697 = vlaneseq
        %v698 = vshrl.u32 %v697, 7
        %v699 = vsub.s32 %v696, %v698
        %v700 = vrot.slane %v693, %v699
        %v701 = vcombine.low %v692, %v700
        %v702 = vcombine.high %v692, %v700
        %v703 = vpack.c.bf16 %v701, %v701
        %v704 = vpack.c.bf16 %v702, %v702
        %705 = vst.msk [vmem:[%s325] sm:$0xf] %vm580, %v703
        %706 = vst.msk [vmem:[%s325 + $0x4] sm:$0xf] %vm580, %v704
        %s707 = sand.u32 %s162, 1
        %s708 = scalar_lea.sflag [#allocation4], %s707
        %s709 = sand.u32 %s162, 1
        %s710 = smul.addr %s709, 8
        %s711 = scalar_lea.vmem [#allocation8], %s710
        %s712 = sand.u32 %s190, 1
        %s713 = scalar_lea.sflag [#allocation10], %s712
        %s714 = sand.u32 %s190, 1
        %s715 = smul.addr %s714, 8
        %s716 = scalar_lea.vmem [#allocation9], %s715
        // Predicated region
        $region53: #{tpu_custom_call.1} parent=39 // pred_check
          %p717 = pneg %p172
        $region54: #{tpu_custom_call.1} parent=39 // pred_check_branch
          %719 = sbr.rel (%p717) target = $region56
        $region55: #{tpu_custom_call.1} parent=39 // pred_region
          %s721 = ssub.s32 128, 128
          %722 = vsyncadd %s708, %s721
          %s723 = smul.addr %s32, 2
          %s724 = sadd.s32 %s33, %s723
          %s725 = smul.addr %s724, 64
          %s726 = scalar_lea.hbm %s5, %s725
          %s727 = sshll.u32 %s711, 4
          %s728 = int_to_ptr.vmem [resolvable:$true] %s727
          %733 = dma.vmem_to_hbm [thread:$0]  %s728, 128, %s726, %s708, 64, 64, 4
        $region56: #{tpu_custom_call.1} parent=39 // pred_fallthru
          _
        // Predicated region
        $region57: #{tpu_custom_call.1} parent=39 // pred_check
          %p734 = pneg %p200
        $region58: #{tpu_custom_call.1} parent=39 // pred_check_branch
          %736 = sbr.rel (%p734) target = $region60
        $region59: #{tpu_custom_call.1} parent=39 // pred_region
          %s738 = ssub.s32 128, 128
          %739 = vsyncadd %s713, %s738
          %s740 = smul.addr %s32, 2
          %s741 = sadd.s32 %s33, %s740
          %s742 = smul.addr %s741, 64
          %s743 = scalar_lea.hbm %s6, %s742
          %s744 = sshll.u32 %s716, 4
          %s745 = int_to_ptr.vmem [resolvable:$true] %s744
          %750 = dma.vmem_to_hbm [thread:$0]  %s745, 128, %s743, %s713, 64, 64, 4
        $region60: #{tpu_custom_call.1} parent=39 // pred_fallthru
          _
      $region40: #{tpu_custom_call.1} parent=5 // pred_fallthru
        _
      %p751 = scmp.le.s32.totalorder 2, %s23
      // Predicated region
      $region61: #{tpu_custom_call.1} parent=5 // pred_check
        %p752 = pneg %p751
      $region62: #{tpu_custom_call.1} parent=5 // pred_check_branch
        %754 = sbr.rel (%p752) target = $region64
      $region63: #{tpu_custom_call.1} parent=5 // pred_region
        %s755 = ssub.s32 %s23, 2
        // Predicated region
        $region65: #{tpu_custom_call.1} parent=63 // pred_check
          %p756 = pneg %p178
        $region66: #{tpu_custom_call.1} parent=63 // pred_check_branch
          %758 = sbr.rel (%p756) target = $region68
        $region67: #{tpu_custom_call.1} parent=63 // pred_region
          %s759 = sand.u32 %s163, 1
          %s760 = scalar_lea.sflag [#allocation4], %s759
          %s761 = sand.u32 %s163, 1
          %s762 = smul.addr %s761, 8
          %s763 = scalar_lea.vmem [#allocation8], %s762
          %764 = dma.done %s760, 128
        $region68: #{tpu_custom_call.1} parent=63 // pred_fallthru
          _
        // Predicated region
        $region69: #{tpu_custom_call.1} parent=63 // pred_check
          %p765 = pneg %p206
        $region70: #{tpu_custom_call.1} parent=63 // pred_check_branch
          %767 = sbr.rel (%p765) target = $region72
        $region71: #{tpu_custom_call.1} parent=63 // pred_region
          %s768 = sand.u32 %s191, 1
          %s769 = scalar_lea.sflag [#allocation10], %s768
          %s770 = sand.u32 %s191, 1
          %s771 = smul.addr %s770, 8
          %s772 = scalar_lea.vmem [#allocation9], %s771
          %773 = dma.done %s769, 128
        $region72: #{tpu_custom_call.1} parent=63 // pred_fallthru
          _
      $region64: #{tpu_custom_call.1} parent=5 // pred_fallthru
        _
    $region6: #{tpu_custom_call.1} parent=1 // loop_footer
      %s27 = sadd.s32 1, %s23
    $region7: #{tpu_custom_call.1} parent=1 // loop_footer_branch
      %22 = sbr.rel target = $region3
    $region8: #{tpu_custom_call.1} parent=1 // loop_exit
      _
    %774 = vsyncpa [#allocation3], 1
    %s775 = scalar_lea.sflag [#allocation3], 1
    %776 = vsyncpa %s775, 1
    %777 = vsyncpa [#allocation6], 1
    %778 = vsyncpa [#allocation4], 1
    %s779 = scalar_lea.sflag [#allocation4], 1
    %780 = vsyncpa %s779, 1
    %781 = vsyncpa [#allocation10], 1
    %s782 = scalar_lea.sflag [#allocation10], 1
    %783 = vsyncpa %s782, 1

</llo_original>
